<compile_context>
chip_gen: v6e
topology: v6e:2x2x1
jax: 0.10.0
libtpu: 0.0.40
codegen_flags: <defaults>
</compile_context>

<pallas_src>
import math

import jax
import jax.numpy as jnp
from jax.experimental import pallas as pl
from jax.experimental.pallas import tpu as pltpu

_AMP = 1.0 / math.sqrt(2.0 * math.pi)
_SQRT2 = math.sqrt(2.0)
_NEG_LOG_AMP = 0.5 * math.log(2.0 * math.pi)  # == -log(_AMP)


def rle_loss3d_kernel(batch_ref, slab_ref, out_ref):
    # slab_ref: (4, rows, 128) f32 in VMEM, fully dense; channels:
    #   [0] predicted joints, [1] sigma logits, [2] gt, [3] vis flag (0 in pad)
    jts = slab_ref[0]
    sig_raw = slab_ref[1]
    gt = slab_ref[2]
    vis = slab_ref[3]

    sigma = jax.nn.sigmoid(sig_raw) + 1e-9
    log_sigma = jnp.log(sigma)

    # |gt - jts| / (sqrt(2)*sigma + 1e-9): approx reciprocal on the EUP slot
    # plus one Newton-Raphson refinement (rel err ~1e-7) instead of an exact
    # VALU divide.
    den = _SQRT2 * sigma + 1e-9
    inv_den = pl.reciprocal(den, approx=True)
    inv_den = inv_den * (2.0 - den * inv_den)

    # nf_loss + logQ fused:  log(sigma) + (log(sigma) - log(amp)) + |.| / den
    per_elem = vis * (2.0 * log_sigma + _NEG_LOG_AMP + jnp.abs(gt - jts) * inv_den)

    loss_sum = jnp.sum(per_elem)
    flag_sum = jnp.sum(vis)  # identical to flag.sum() of the reference

    batch = batch_ref[0]
    # size_average=True: divide by batch iff flag.sum() > 0, else plain sum.
    out_ref[0, 0] = jnp.where(flag_sum > 0.0, loss_sum / batch, loss_sum)


def rle_loss_3d(pose_3d_pred, pose_3d_gt, vis_flag):
    """Matches RLELoss3D(size_average=True).forward(pred, gt, vis)."""
    B, J, C = pose_3d_pred.shape
    assert C == 6, pose_3d_pred.shape
    m = B * J * 3
    rows = pl.cdiv(m, 8 * 128) * 8          # rows per channel, multiple of 8
    m_pad = rows * 128

    # Single fused repack: slice/broadcast into four (1, m) rows, concat, pad,
    # reshape.  Zero padding is safe: vis == 0 in the pad region => zero loss.
    jts = pose_3d_pred[:, :, 0:3].reshape(1, m)
    sig = pose_3d_pred[:, :, 3:6].reshape(1, m)
    gt = pose_3d_gt.reshape(1, m)
    vis = jnp.broadcast_to(vis_flag[:, :, None], (B, J, 3)).reshape(1, m)
    packed = jnp.concatenate([jts, sig, gt, vis], axis=0).astype(jnp.float32)
    if m_pad != m:
        packed = jnp.pad(packed, ((0, 0), (0, m_pad - m)))
    slab = packed.reshape(4, rows, 128)

    # Runtime SMEM scalar (no retrace of the kernel per batch size).
    batch = jnp.full((1,), B, dtype=jnp.float32)

    # TODO(synk): only the default size_average=True constructor path is
    # exposed here (matches the module defaults).
    out = pl.pallas_call(
        rle_loss3d_kernel,
        out_shape=jax.ShapeDtypeStruct((1, 1), jnp.float32),
        in_specs=[
            pl.BlockSpec(memory_space=pltpu.MemorySpace.SMEM),
            pl.BlockSpec(memory_space=pltpu.MemorySpace.VMEM),
        ],
        out_specs=pl.BlockSpec(memory_space=pltpu.MemorySpace.SMEM),
    )(batch, slab)
    return out[0, 0]


def _reference(pose_3d_pred, pose_3d_gt, vis_flag):
    # Pure-JAX mirror of the torch module, for a sanity check.
    sigma = jax.nn.sigmoid(pose_3d_pred[:, :, 3:6]) + 1e-9
    jts = pose_3d_pred[:, :, :3]
    flag = jnp.concatenate([vis_flag[:, :, None]] * 3, axis=2)
    gt = pose_3d_gt.reshape(jts.shape)
    nf = jnp.log(sigma) * flag
    q = (jnp.log(sigma / _AMP) + jnp.abs(gt - jts) / (_SQRT2 * sigma + 1e-9)) * flag
    loss = nf + q
    return jnp.where(flag.sum() > 0, loss.sum() / loss.shape[0], loss.sum())


if __name__ == "__main__":
    B, J = 2, 16
    key = jax.random.PRNGKey(0)
    k1, k2, k3 = jax.random.split(key, 3)

    pose_3d_pred = jax.random.normal(k1, (B, J, 6), dtype=jnp.float32)
    pose_3d_gt = jax.random.normal(k2, (B, J, 3), dtype=jnp.float32)
    vis_flag = jax.random.bernoulli(k3, 0.8, (B, J)).astype(jnp.float32)

    out = rle_loss_3d(pose_3d_pred, pose_3d_gt, vis_flag)
    out = jax.block_until_ready(out)

    ref = _reference(pose_3d_pred, pose_3d_gt, vis_flag)
    assert jnp.allclose(out, ref, rtol=1e-5, atol=1e-5), (out, ref)

    print("KERNEL_OK")
</pallas_src>

<mosaic_0001>
module attributes {stable_mosaic.version = 11 : i64} {
  func.func @rle_loss3d_kernel(%arg0: memref<1xf32, #tpu.memory_space<smem>>, %arg1: memref<4x8x128xf32, #tpu.memory_space<vmem>>, %arg2: memref<1x1xf32, #tpu.memory_space<smem>>) attributes {dimension_semantics = [], scalar_prefetch = 0 : i64, scratch_operands = 0 : i64, tpu.core_type = #tpu.core_type<tc>} {
    %c0 = arith.constant 0 : index
    %c0_0 = arith.constant 0 : index
    %c0_1 = arith.constant 0 : index
    %0 = vector.load %arg1[%c0, %c0_0, %c0_1] : memref<4x8x128xf32, #tpu.memory_space<vmem>>, vector<1x8x128xf32>
    %1 = vector.shape_cast %0 : vector<1x8x128xf32> to vector<8x128xf32>
    %c1 = arith.constant 1 : index
    %c0_2 = arith.constant 0 : index
    %c0_3 = arith.constant 0 : index
    %2 = vector.load %arg1[%c1, %c0_2, %c0_3] : memref<4x8x128xf32, #tpu.memory_space<vmem>>, vector<1x8x128xf32>
    %3 = vector.shape_cast %2 : vector<1x8x128xf32> to vector<8x128xf32>
    %c2 = arith.constant 2 : index
    %c0_4 = arith.constant 0 : index
    %c0_5 = arith.constant 0 : index
    %4 = vector.load %arg1[%c2, %c0_4, %c0_5] : memref<4x8x128xf32, #tpu.memory_space<vmem>>, vector<1x8x128xf32>
    %5 = vector.shape_cast %4 : vector<1x8x128xf32> to vector<8x128xf32>
    %c3 = arith.constant 3 : index
    %c0_6 = arith.constant 0 : index
    %c0_7 = arith.constant 0 : index
    %6 = vector.load %arg1[%c3, %c0_6, %c0_7] : memref<4x8x128xf32, #tpu.memory_space<vmem>>, vector<1x8x128xf32>
    %7 = vector.shape_cast %6 : vector<1x8x128xf32> to vector<8x128xf32>
    %8 = arith.negf %3 : vector<8x128xf32>
    %9 = math.exp %8 : vector<8x128xf32>
    %cst = arith.constant 1.000000e+00 : f32
    %10 = vector.broadcast %cst : f32 to vector<8x128xf32>
    %11 = arith.addf %10, %9 : vector<8x128xf32>
    %12 = arith.divf %10, %11 : vector<8x128xf32>
    %cst_8 = arith.constant 9.99999971E-10 : f32
    %13 = vector.broadcast %cst_8 : f32 to vector<8x128xf32>
    %14 = arith.addf %12, %13 : vector<8x128xf32>
    %15 = math.log %14 : vector<8x128xf32>
    %cst_9 = arith.constant 1.41421354 : f32
    %16 = vector.broadcast %cst_9 : f32 to vector<8x128xf32>
    %17 = arith.mulf %16, %14 : vector<8x128xf32>
    %cst_10 = arith.constant 9.99999971E-10 : f32
    %18 = vector.broadcast %cst_10 : f32 to vector<8x128xf32>
    %19 = arith.addf %17, %18 : vector<8x128xf32>
    %20 = tpu.reciprocal %19 {approx = true} : vector<8x128xf32> -> vector<8x128xf32>
    %21 = arith.mulf %19, %20 : vector<8x128xf32>
    %cst_11 = arith.constant 2.000000e+00 : f32
    %22 = vector.broadcast %cst_11 : f32 to vector<8x128xf32>
    %23 = arith.subf %22, %21 : vector<8x128xf32>
    %24 = arith.mulf %20, %23 : vector<8x128xf32>
    %cst_12 = arith.constant 2.000000e+00 : f32
    %25 = vector.broadcast %cst_12 : f32 to vector<8x128xf32>
    %26 = arith.mulf %25, %15 : vector<8x128xf32>
    %cst_13 = arith.constant 0.918938517 : f32
    %27 = vector.broadcast %cst_13 : f32 to vector<8x128xf32>
    %28 = arith.addf %26, %27 : vector<8x128xf32>
    %29 = arith.subf %5, %1 : vector<8x128xf32>
    %30 = math.absf %29 : vector<8x128xf32>
    %31 = arith.mulf %30, %24 : vector<8x128xf32>
    %32 = arith.addf %28, %31 : vector<8x128xf32>
    %33 = arith.mulf %7, %32 : vector<8x128xf32>
    %34 = vector.shape_cast %33 : vector<8x128xf32> to vector<1x8x128xf32>
    %cst_14 = arith.constant dense<0.000000e+00> : vector<1xf32>
    %35 = vector.multi_reduction <add>, %34, %cst_14 [1, 2] : vector<1x8x128xf32> to vector<1xf32>
    %36 = vector.shape_cast %35 : vector<1xf32> to vector<1x1x1xf32>
    %37 = vector.extract %36[0, 0, 0] : f32 from vector<1x1x1xf32>
    %38 = vector.shape_cast %7 : vector<8x128xf32> to vector<1x8x128xf32>
    %cst_15 = arith.constant dense<0.000000e+00> : vector<1xf32>
    %39 = vector.multi_reduction <add>, %38, %cst_15 [1, 2] : vector<1x8x128xf32> to vector<1xf32>
    %40 = vector.shape_cast %39 : vector<1xf32> to vector<1x1x1xf32>
    %41 = vector.extract %40[0, 0, 0] : f32 from vector<1x1x1xf32>
    %c0_16 = arith.constant 0 : index
    %42 = memref.load %arg0[%c0_16] : memref<1xf32, #tpu.memory_space<smem>>
    %cst_17 = arith.constant 0.000000e+00 : f32
    %43 = arith.cmpf ogt, %41, %cst_17 : f32
    %44 = arith.divf %37, %42 : f32
    %45 = arith.select %43, %44, %37 : f32
    %c0_18 = arith.constant 0 : index
    %c0_19 = arith.constant 0 : index
    %46 = memref.load %arg2[%c0_18, %c0_19] : memref<1x1xf32, #tpu.memory_space<smem>>
    memref.store %45, %arg2[%c0_18, %c0_19] : memref<1x1xf32, #tpu.memory_space<smem>>
    return
  }
}

</mosaic_0001>

<llo_original>
// kernel: tpu_custom_call.1
$region0: #{tpu_custom_call.1}
  #allocation0 [shape = 'u32[]', space=smem, size = 0x4, offset = 0x4, fixed_abs, tag = 'smem constant byte address 0x4 - core index']
  #allocation1 [shape = 'u32[144,128]{1,0:T(1,128)}', space=vmem, size = 0x12000, scoped, tag = 'internal scratch']
  #allocation2 [shape = 'f32[1]{0:T(128)S(6)}', space=smem, size = 0x200, scoped, tag = 'scoped memory for tpu_custom_call.1']
  %s0 = inlined_call_operand.<no memory space> [shape: f32[1], index: 0, kind: input, shape index: {}]
  %s1 = inlined_call_operand.hbm [shape: f32[4,8,128], index: 1, kind: input, shape index: {}]
  %s2 = inlined_call_operand.hbm [shape: f32[1,1], index: 2, kind: output, shape index: {}]
  %s3 = sld [smem:[#allocation0]]
  $region22: #{tpu_custom_call.1} parent=0
    _
  %s5 = ssub.s32 1, %s3
  %s6 = scalar_select 0, %s5, %s3
  %7 = sst [smem:[#allocation2]] %s0
  $region1: #{tpu_custom_call.1} parent=0
    #allocation3 [shape = 'u8[16384]{0}', space=vmem, size = 0x4000, scoped, tag = 'input window, operand 1, single buffered']
    #allocation4 [shape = 's32[1]{0}', space=sflag, size = 0x4, scoped, tag = 'scoped memory for tpu_custom_call.1']
    #allocation5 [shape = 's32[1]{0}', space=sflag, size = 0x4, scoped, tag = 'scoped memory for tpu_custom_call.1']
    #allocation6 [shape = 'u8[512]{0}', space=smem, size = 0x200, scoped, tag = 'output window, operand 0, single buffered']
    %8 = vsyncpa [#allocation4], 0
    %9 = vsyncpa [#allocation5], 0
    // Predicated region
    $region2: #{tpu_custom_call.1} parent=1 // pred_check
      _
    $region3: #{tpu_custom_call.1} parent=1 // pred_check_branch
      %11 = sbr.rel (0) target = $region5
    $region4: #{tpu_custom_call.1} parent=1 // pred_region
      _
    $region5: #{tpu_custom_call.1} parent=1 // pred_fallthru
      _
    // Predicated region
    $region6: #{tpu_custom_call.1} parent=1 // pred_check
      _
    $region7: #{tpu_custom_call.1} parent=1 // pred_check_branch
      %13 = sbr.rel (0) target = $region9
    $region8: #{tpu_custom_call.1} parent=1 // pred_region
      %s15 = ssub.s32 512, 512
      %16 = vsyncadd [#allocation4], %s15
      %s17 = sshll.u32 [#allocation3], 4
      %s18 = int_to_ptr.vmem [resolvable:$true] %s17
      %23 = dma.hbm_to_vmem [thread:$0]  %s1, 512, %s18, [#allocation4], 128, 128, 8
    $region9: #{tpu_custom_call.1} parent=1 // pred_fallthru
      _
    // Predicated region
    $region10: #{tpu_custom_call.1} parent=1 // pred_check
      _
    $region11: #{tpu_custom_call.1} parent=1 // pred_check_branch
      %25 = sbr.rel (0) target = $region13
    $region12: #{tpu_custom_call.1} parent=1 // pred_region
      %26 = dma.done [#allocation4], 512
    $region13: #{tpu_custom_call.1} parent=1 // pred_fallthru
      _
    %v27 = vld [vmem:[#allocation3] sm:$0xff]
    %s28 = scalar_lea.vmem [#allocation3], 8
    %v29 = vld [vmem:[%s28] sm:$0xff]
    %s30 = scalar_lea.vmem [#allocation3], 16
    %v31 = vld [vmem:[%s30] sm:$0xff]
    %s32 = scalar_lea.vmem [#allocation3], 24
    %v33 = vld [vmem:[%s32] sm:$0xff]
    %v34 = vxor.u32 %v29, 2147483648
    %v35 = vmul.f32 %v34, 1.442695
    %v36 = vpow.pop %v35
    %v37 = vadd.f32 %v36, 1.0
    %v38 = vrcp.pop %v37
    %v39 = vmul.f32 1.0, %v38
    %v40 = vadd.f32 %v39, 1e-09
    %v41 = vlog2.pop %v40
    %v42 = vmul.f32 %v41, 0.6931472
    %v43 = vmul.f32 %v40, 1.4142135
    %v44 = vadd.f32 %v43, 1e-09
    %v45 = vrcp.pop %v44
    %v46 = vmul.f32 %v44, %v45
    %v47 = vsub.f32 2.0, %v46
    %v48 = vmul.f32 %v45, %v47
    %v49 = vmul.f32 %v42, 2.0
    %v50 = vadd.f32 %v49, 0.9189385
    %v51 = vsub.f32 %v31, %v27
    %v52 = vand.u32 2147483647, %v51
    %v53 = vmul.f32 %v52, %v48
    %v54 = vadd.f32 %v50, %v53
    %v55 = vmul.f32 %v33, %v54
    %56 = vadd.xlane.f32.xlu0 %v55
    %v57 = vpop.xlane.xlu0 %56
    %v58 = vrot.slane %v57, 4
    %v59 = vadd.f32 %v57, %v58
    %v60 = vrot.slane %v59, 2
    %v61 = vadd.f32 %v59, %v60
    %v62 = vrot.slane %v61, 1
    %v63 = vadd.f32 %v61, %v62
    %s64 = vtos %v63
    %65 = vadd.xlane.f32.xlu0 %v33
    %v66 = vpop.xlane.xlu0 %65
    %v67 = vrot.slane %v66, 4
    %v68 = vadd.f32 %v66, %v67
    %v69 = vrot.slane %v68, 2
    %v70 = vadd.f32 %v68, %v69
    %v71 = vrot.slane %v70, 1
    %v72 = vadd.f32 %v70, %v71
    %s73 = vtos %v72
    %s74 = sld [smem:[#allocation2]]
    %p75 = scmp.gt.f32.partialorder %s73, 0.0
    %v76 = vstv %s74
    %v77 = vrcp.pop %v76
    %s78 = vtos %v77
    %s79 = smul.f32 %s64, %s78
    %s80 = scalar_select %p75, %s79, %s64
    %s81 = scalar_lea.smem [#allocation6], 0
    %82 = sst [smem:[%s81]] %s80
    // Predicated region
    $region14: #{tpu_custom_call.1} parent=1 // pred_check
      _
    $region15: #{tpu_custom_call.1} parent=1 // pred_check_branch
      %84 = sbr.rel (0) target = $region17
    $region16: #{tpu_custom_call.1} parent=1 // pred_region
      %s86 = ssub.s32 16, 16
      %87 = vsyncadd [#allocation5], %s86
      %90 = dma.smem_to_hbm [#allocation6], 16, %s2, [#allocation5]
    $region17: #{tpu_custom_call.1} parent=1 // pred_fallthru
      _
    // Predicated region
    $region18: #{tpu_custom_call.1} parent=1 // pred_check
      _
    $region19: #{tpu_custom_call.1} parent=1 // pred_check_branch
      %92 = sbr.rel (0) target = $region21
    $region20: #{tpu_custom_call.1} parent=1 // pred_region
      %93 = dma.done [#allocation5], 16
    $region21: #{tpu_custom_call.1} parent=1 // pred_fallthru
      _
    %94 = sfence
    %95 = vsyncpa [#allocation4], 1
    %96 = vsyncpa [#allocation5], 1

</llo_original>
